<compile_context>
chip_gen: v5e
topology: v5e:2x2
jax: 0.10.0
libtpu: 0.0.40
codegen_flags: <defaults>
</compile_context>

<pallas_src>
import jax
import jax.numpy as jnp
from jax.experimental import pallas as pl
from jax.experimental.pallas import tpu as pltpu


_LANE = 128


def _round_up(n, m):
    return ((n + m - 1) // m) * m


# ----------------------------------------------------------------------------
# Pallas kernel: one (TM, K) tile of patches @ resident (K, E_pad) weight
# ----------------------------------------------------------------------------
def _patch_proj_kernel(x_ref, w_ref, b_ref, o_ref):
    # x_ref: (TM, K)    bf16 patch tile (streamed over the grid)
    # w_ref: (K, E_pad) bf16 weight     (resident across the grid)
    # b_ref: (1, E_pad) f32 bias        (resident)
    # o_ref: (TM, E_pad) f32 lane-dense output tile
    acc = jnp.dot(x_ref[...], w_ref[...], preferred_element_type=jnp.float32)
    o_ref[...] = acc + b_ref[...]


def _choose_tm(M, K, E_pad, *, max_tm=512, vmem_budget_bytes=24 << 20):
    """Pick the M-tile so 2x input + 2x output buffers + resident weight fit
    comfortably under the scoped-VMEM budget (re-derived per shape, so the
    same code stays safe on v7x's smaller VMEM)."""
    in_bytes, out_bytes = 2, 4                           # bf16 in, f32 out
    fixed = K * E_pad * in_bytes + E_pad * out_bytes     # resident weight+bias
    per_row = 2 * K * in_bytes + 2 * E_pad * out_bytes   # double-buffered tiles
    cap = max(_LANE, (vmem_budget_bytes - fixed) // max(per_row, 1))
    tm = min(max_tm, cap, _round_up(M, _LANE))
    return int(max(_LANE, (tm // _LANE) * _LANE))


def patch_proj(patches, w_kE, bias_2d, *, max_tm=512,
               vmem_budget_bytes=24 << 20):
    """patches: (M, K) bf16; w_kE: (K, E_pad) bf16; bias_2d: (1, E_pad) f32.
    Returns (M, E_pad) f32."""
    M, K = patches.shape
    K_w, E_pad = w_kE.shape
    assert K == K_w, (K, K_w)
    assert E_pad % _LANE == 0, E_pad

    TM = _choose_tm(M, K, E_pad, max_tm=max_tm,
                    vmem_budget_bytes=vmem_budget_bytes)
    M_pad = _round_up(M, TM)
    if M_pad != M:
        # Zero-pad the tail tile (at real ViT sizes M is typically already a
        # multiple of TM, so this is a no-op there).
        patches = jnp.pad(patches, ((0, M_pad - M), (0, 0)))

    grid = (M_pad // TM,)
    cost = pl.CostEstimate(
        flops=2 * M_pad * K * E_pad,
        transcendentals=0,
        bytes_accessed=(M_pad * K * 2 + K * E_pad * 2 + E_pad * 4
                        + M_pad * E_pad * 4),
    )

    out = pl.pallas_call(
        _patch_proj_kernel,
        out_shape=jax.ShapeDtypeStruct((M_pad, E_pad), jnp.float32),
        grid_spec=pltpu.PrefetchScalarGridSpec(
            num_scalar_prefetch=0,
            grid=grid,
            in_specs=[
                pl.BlockSpec((TM, K), lambda i: (i, 0)),      # streamed tiles
                pl.BlockSpec((K, E_pad), lambda i: (0, 0)),   # resident weight
                pl.BlockSpec((1, E_pad), lambda i: (0, 0)),   # resident bias
            ],
            out_specs=pl.BlockSpec((TM, E_pad), lambda i: (i, 0)),
        ),
        compiler_params=pltpu.CompilerParams(
            dimension_semantics=("parallel",),  # v7x: shard M-tiles over 2 TCs
            vmem_limit_bytes=32 * 1024 * 1024,
        ),
        cost_estimate=cost,
    )(patches, w_kE, bias_2d)
    return out[:M]


# ----------------------------------------------------------------------------
# One-time parameter packing (hoisted out of the per-call forward)
# ----------------------------------------------------------------------------
def prepare_patch_embed_params(weight, bias):
    """weight: (E, C, ph, pw) PyTorch Conv2d layout; bias: (E,).
    Returns bf16 (K, E_pad) weight (flatten order (C, ph, pw)) and f32
    (1, E_pad) bias, with E padded to a lane-dense multiple of 128."""
    E, C, ph, pw = weight.shape
    K = C * ph * pw
    E_pad = _round_up(E, _LANE)
    w_t = weight.reshape(E, K).T                          # (K, E)
    if E_pad != E:
        w_t = jnp.pad(w_t, ((0, 0), (0, E_pad - E)))
        b = jnp.pad(bias, (0, E_pad - E))
    else:
        b = bias
    return w_t.astype(jnp.bfloat16), b.astype(jnp.float32).reshape(1, E_pad)


# ----------------------------------------------------------------------------
# PatchEmbed forward (norm_layer=None -> Identity)
# ----------------------------------------------------------------------------
def _extract_patches_bf16(x, patch_size, stride):
    """(B, C, H, W) -> ((B*gh*gw, C*ph*pw) bf16, (gh, gw)).
    Flatten order (C, ph, pw) matches weight.reshape(E, C*ph*pw)."""
    B, C, H, W = x.shape
    ph, pw = patch_size
    gh = (H - ph) // stride + 1
    gw = (W - pw) // stride + 1
    xb = x.astype(jnp.bfloat16)
    if stride == ph and stride == pw and H == gh * ph and W == gw * pw:
        p = xb.reshape(B, C, gh, ph, gw, pw)
    else:
        # General (possibly overlapping) stride: explicit gather with a
        # flatten order we control (verified against the conv reference).
        ii = (jnp.arange(gh) * stride)[:, None] + jnp.arange(ph)[None, :]
        jj = (jnp.arange(gw) * stride)[:, None] + jnp.arange(pw)[None, :]
        p = xb[:, :, ii[:, :, None, None], jj[None, None, :, :]]
    p = p.transpose(0, 2, 4, 1, 3, 5)                     # (B, gh, gw, C, ph, pw)
    return p.reshape(B * gh * gw, C * ph * pw), (gh, gw)


def patch_embed_forward(x, w_kE, bias_2d, *, img_size, patch_size, stride,
                        embed_dim, flatten=True):
    """x: (B, C, H, W) f32; w_kE / bias_2d from prepare_patch_embed_params."""
    B, C, H, W = x.shape
    assert H == img_size[0] and W == img_size[1], (
        f"Input image size ({H}*{W}) doesn't match model "
        f"({img_size[0]}*{img_size[1]}).")
    # TODO(synk): patch extraction is kept as one bf16 XLA layout pass over the
    # image rather than fused into the kernel BlockSpec; full fusion would need
    # an in-kernel (ph, gw) transpose to preserve the full-K MXU matmul.
    patches, (gh, gw) = _extract_patches_bf16(x, patch_size, stride)
    out = patch_proj(patches, w_kE, bias_2d)              # (M, E_pad) f32
    out = out[:, :embed_dim].reshape(B, gh * gw, embed_dim)
    if not flatten:
        out = out.reshape(B, gh, gw, embed_dim).transpose(0, 3, 1, 2)
    # norm = Identity
    return out


# ----------------------------------------------------------------------------
# Reference (pure JAX) for correctness check
# ----------------------------------------------------------------------------
def patch_embed_ref(x, weight, bias, *, stride):
    y = jax.lax.conv_general_dilated(
        x, weight, window_strides=(stride, stride), padding="VALID",
        dimension_numbers=("NCHW", "OIHW", "NCHW"))
    y = y + bias[None, :, None, None]
    B, E, gh, gw = y.shape
    return y.reshape(B, E, gh * gw).transpose(0, 2, 1)


if __name__ == "__main__":
    # Small shapes consistent with the module:
    # img_size=16, patch_size=4, in_chans=4, embed_dim=32, batch=2
    B, C, H, W = 2, 4, 16, 16
    ph = pw = 4
    E = 32

    key = jax.random.PRNGKey(0)
    kx, kw, kb = jax.random.split(key, 3)
    x = jax.random.normal(kx, (B, C, H, W), dtype=jnp.float32)
    # Deterministic synthetic Conv2d parameters (PyTorch layout (E, C, ph, pw)).
    weight = 0.02 * jax.random.normal(kw, (E, C, ph, pw), dtype=jnp.float32)
    bias = 0.01 * jax.random.normal(kb, (E,), dtype=jnp.float32)

    # Hoisted, one-time parameter packing.
    w_kE, bias_2d = prepare_patch_embed_params(weight, bias)

    # Reference uses bf16-rounded inputs (the kernel feeds the MXU in bf16 with
    # an f32 accumulator), so only accumulation-order differences remain.
    x_r = x.astype(jnp.bfloat16).astype(jnp.float32)
    w_r = weight.astype(jnp.bfloat16).astype(jnp.float32)

    # Case 1: non-overlapping patches (stride == patch) — the Vim config.
    stride = 4
    out = patch_embed_forward(
        x, w_kE, bias_2d, img_size=(H, W), patch_size=(ph, pw),
        stride=stride, embed_dim=E, flatten=True)
    out = jax.block_until_ready(out)
    ref = patch_embed_ref(x_r, w_r, bias, stride=stride)
    n_patches = ((H - ph) // stride + 1) * ((W - pw) // stride + 1)
    assert out.shape == (B, n_patches, E), out.shape
    assert jnp.allclose(out, ref, atol=1e-2, rtol=1e-2), (
        float(jnp.max(jnp.abs(out - ref))))

    # Case 2: overlapping patches (stride < patch) — exercises the general
    # gather path whose flatten ordering was flagged in review.
    stride = 2
    out2 = patch_embed_forward(
        x, w_kE, bias_2d, img_size=(H, W), patch_size=(ph, pw),
        stride=stride, embed_dim=E, flatten=True)
    out2 = jax.block_until_ready(out2)
    ref2 = patch_embed_ref(x_r, w_r, bias, stride=stride)
    n_patches2 = ((H - ph) // stride + 1) * ((W - pw) // stride + 1)
    assert out2.shape == (B, n_patches2, E), out2.shape
    assert jnp.allclose(out2, ref2, atol=1e-2, rtol=1e-2), (
        float(jnp.max(jnp.abs(out2 - ref2))))

    print("KERNEL_OK")
</pallas_src>

<mosaic_0001>
module attributes {stable_mosaic.version = 11 : i64} {
  func.func @_patch_proj_kernel(%arg0: i32, %arg1: memref<128x64xbf16, #tpu.memory_space<vmem>>, %arg2: memref<64x128xbf16, #tpu.memory_space<vmem>>, %arg3: memref<1x128xf32, #tpu.memory_space<vmem>>, %arg4: memref<128x128xf32, #tpu.memory_space<vmem>>) attributes {dimension_semantics = [#tpu.dimension_semantics<parallel>], iteration_bounds = array<i64: 1>, scalar_prefetch = 0 : i64, scratch_operands = 0 : i64, tpu.core_type = #tpu.core_type<tc>, window_params = [{transform_indices = @transform_0, window_bounds = array<i64: 128, 64>}, {pipeline_mode = #tpu.pipeline_mode<synchronous>, transform_indices = @transform_1, window_bounds = array<i64: 64, 128>}, {pipeline_mode = #tpu.pipeline_mode<synchronous>, transform_indices = @transform_2, window_bounds = array<i64: 1, 128>}, {transform_indices = @transform_3, window_bounds = array<i64: 128, 128>}]} {
    %c0 = arith.constant 0 : index
    %c0_0 = arith.constant 0 : index
    %0 = vector.load %arg1[%c0, %c0_0] : memref<128x64xbf16, #tpu.memory_space<vmem>>, vector<128x64xbf16>
    %c0_1 = arith.constant 0 : index
    %c0_2 = arith.constant 0 : index
    %1 = vector.load %arg2[%c0_1, %c0_2] : memref<64x128xbf16, #tpu.memory_space<vmem>>, vector<64x128xbf16>
    %cst = arith.constant dense<0.000000e+00> : vector<128x128xf32>
    %2 = tpu.matmul %0, %1, %cst {dimension_numbers = #tpu.dot_dimension_numbers<[1], [0], [0], [1], [0, 0, 1, 1], [], []>} : vector<128x64xbf16>, vector<64x128xbf16>, vector<128x128xf32> -> vector<128x128xf32>
    %c0_3 = arith.constant 0 : index
    %c0_4 = arith.constant 0 : index
    %3 = vector.load %arg3[%c0_3, %c0_4] : memref<1x128xf32, #tpu.memory_space<vmem>>, vector<1x128xf32>
    %4 = vector.broadcast %3 : vector<1x128xf32> to vector<128x128xf32>
    %5 = arith.addf %2, %4 : vector<128x128xf32>
    %c0_5 = arith.constant 0 : index
    %c0_6 = arith.constant 0 : index
    %6 = vector.load %arg4[%c0_5, %c0_6] : memref<128x128xf32, #tpu.memory_space<vmem>>, vector<128x128xf32>
    tpu.vector_store %arg4[%c0_5, %c0_6], %5 {strides = array<i32>} : memref<128x128xf32, #tpu.memory_space<vmem>>, vector<128x128xf32>,
    return
  }
  func.func @transform_0(%arg0: i32) -> (i32, i32) {
    %c0_i32 = arith.constant 0 : i32
    %c0_i32_0 = arith.constant 0 : i32
    return %arg0, %c0_i32 : i32, i32
  }
  func.func @transform_1(%arg0: i32) -> (i32, i32) {
    %c0_i32 = arith.constant 0 : i32
    %c0_i32_0 = arith.constant 0 : i32
    %c0_i32_1 = arith.constant 0 : i32
    return %c0_i32, %c0_i32_0 : i32, i32
  }
  func.func @transform_2(%arg0: i32) -> (i32, i32) {
    %c0_i32 = arith.constant 0 : i32
    %c0_i32_0 = arith.constant 0 : i32
    %c0_i32_1 = arith.constant 0 : i32
    return %c0_i32, %c0_i32_0 : i32, i32
  }
  func.func @transform_3(%arg0: i32) -> (i32, i32) {
    %c0_i32 = arith.constant 0 : i32
    %c0_i32_0 = arith.constant 0 : i32
    return %arg0, %c0_i32 : i32, i32
  }
}

</mosaic_0001>

<llo_original>
// kernel: tpu_custom_call.1
$region0: #{tpu_custom_call.1}
  #allocation0 [shape = 'u32[]', space=smem, size = 0x4, offset = 0x4, fixed_abs, tag = 'smem constant byte address 0x4 - core index']
  #allocation1 [shape = 'u32[72,128]{1,0:T(1,128)}', space=vmem, size = 0x9000, scoped, tag = 'internal scratch']
  %s0 = inlined_call_operand.vmem [shape: bf16[128,64], index: 0, kind: input, shape index: {}]
  %s1 = inlined_call_operand.vmem [shape: bf16[64,128], index: 1, kind: input, shape index: {}]
  %s2 = inlined_call_operand.vmem [shape: f32[1,128], index: 2, kind: input, shape index: {}]
  %s3 = inlined_call_operand.hbm [shape: f32[128,128], index: 3, kind: output, shape index: {}]
  %s4 = sld [smem:[#allocation0]]
  $region22: #{tpu_custom_call.1} parent=0
    _
  %s6 = ssub.s32 1, %s4
  %s7 = scalar_select 0, %s6, %s4
  $region1: #{tpu_custom_call.1} parent=0
    #allocation2 [shape = 'u8[65536]{0}', space=vmem, size = 0x10000, scoped, tag = 'output window, operand 0, single buffered']
    #allocation3 [shape = 's32[1]{0}', space=sflag, size = 0x4, scoped, tag = 'scoped memory for tpu_custom_call.1']
    %8 = vsyncpa [#allocation3], 0
    // Predicated region
    $region2: #{tpu_custom_call.1} parent=1 // pred_check
      _
    $region3: #{tpu_custom_call.1} parent=1 // pred_check_branch
      %10 = sbr.rel (0) target = $region5
    $region4: #{tpu_custom_call.1} parent=1 // pred_region
      _
    $region5: #{tpu_custom_call.1} parent=1 // pred_fallthru
      _
    // Predicated region
    $region6: #{tpu_custom_call.1} parent=1 // pred_check
      _
    $region7: #{tpu_custom_call.1} parent=1 // pred_check_branch
      %12 = sbr.rel (0) target = $region9
    $region8: #{tpu_custom_call.1} parent=1 // pred_region
      _
    $region9: #{tpu_custom_call.1} parent=1 // pred_fallthru
      _
    // Predicated region
    $region10: #{tpu_custom_call.1} parent=1 // pred_check
      _
    $region11: #{tpu_custom_call.1} parent=1 // pred_check_branch
      %14 = sbr.rel (0) target = $region13
    $region12: #{tpu_custom_call.1} parent=1 // pred_region
      _
    $region13: #{tpu_custom_call.1} parent=1 // pred_fallthru
      _
    %v16 = vld [vmem:[%s0] sm:$0xf]
    %v17 = vld [vmem:[%s0 + $0x4] sm:$0xf]
    %v18 = vld [vmem:[%s0 + $0x8] sm:$0xf]
    %v19 = vld [vmem:[%s0 + $0xc] sm:$0xf]
    %v20 = vld [vmem:[%s0 + $0x10] sm:$0xf]
    %v21 = vld [vmem:[%s0 + $0x14] sm:$0xf]
    %v22 = vld [vmem:[%s0 + $0x18] sm:$0xf]
    %v23 = vld [vmem:[%s0 + $0x1c] sm:$0xf]
    %v24 = vld [vmem:[%s0 + $0x20] sm:$0xf]
    %v25 = vld [vmem:[%s0 + $0x24] sm:$0xf]
    %v26 = vld [vmem:[%s0 + $0x28] sm:$0xf]
    %v27 = vld [vmem:[%s0 + $0x2c] sm:$0xf]
    %v28 = vld [vmem:[%s0 + $0x30] sm:$0xf]
    %v29 = vld [vmem:[%s0 + $0x34] sm:$0xf]
    %v30 = vld [vmem:[%s0 + $0x38] sm:$0xf]
    %v31 = vld [vmem:[%s0 + $0x3c] sm:$0xf]
    %v32 = vld [vmem:[%s1] sm:$0xf]
    %v33 = vld [vmem:[%s1 + $0x4] sm:$0xf]
    %v34 = vld [vmem:[%s1 + $0x8] sm:$0xf]
    %v35 = vld [vmem:[%s1 + $0xc] sm:$0xf]
    %v36 = vld [vmem:[%s1 + $0x10] sm:$0xf]
    %v37 = vld [vmem:[%s1 + $0x14] sm:$0xf]
    %v38 = vld [vmem:[%s1 + $0x18] sm:$0xf]
    %v39 = vld [vmem:[%s1 + $0x1c] sm:$0xf]
    %v40 = vld [vmem:[%s2] sm:$0x1]
    %v42 = vperm.slane %v40, 0
    %v60 = vunpack.c.l.b16 %v16
    %v61 = vunpack.c.l.b16 %v17
    %v62 = vunpack.c.l.b16 %v18
    %v63 = vunpack.c.l.b16 %v19
    %v64 = vunpack.c.l.b16 %v20
    %v65 = vunpack.c.l.b16 %v21
    %v66 = vunpack.c.l.b16 %v22
    %v67 = vunpack.c.l.b16 %v23
    %v68 = vunpack.c.l.b16 %v24
    %v69 = vunpack.c.l.b16 %v25
    %v70 = vunpack.c.l.b16 %v26
    %v71 = vunpack.c.l.b16 %v27
    %v72 = vunpack.c.l.b16 %v28
    %v73 = vunpack.c.l.b16 %v29
    %v74 = vunpack.c.l.b16 %v30
    %v75 = vunpack.c.l.b16 %v31
    %v76 = vpack.c.b16 %v61, %v60
    %v77 = vpack.c.b16 %v63, %v62
    %v78 = vpack.c.b16 %v65, %v64
    %v79 = vpack.c.b16 %v67, %v66
    %v80 = vpack.c.b16 %v69, %v68
    %v81 = vpack.c.b16 %v71, %v70
    %v82 = vpack.c.b16 %v73, %v72
    %v83 = vpack.c.b16 %v75, %v74
    %v92 = vunpack.c.l.b16 %v32
    %v93 = vunpack.c.l.b16 %v33
    %v94 = vunpack.c.l.b16 %v34
    %v95 = vunpack.c.l.b16 %v35
    %v96 = vunpack.c.l.b16 %v36
    %v97 = vunpack.c.l.b16 %v37
    %v98 = vunpack.c.l.b16 %v38
    %v99 = vunpack.c.l.b16 %v39
    %v100 = vpack.c.b16 %v93, %v92
    %v101 = vpack.c.b16 %v95, %v94
    %v102 = vpack.c.b16 %v97, %v96
    %v103 = vpack.c.b16 %v99, %v98
    %vm108 = vcmask 523264
    %v110 = vsel %vm108, %v76, 0
    %v113 = vsel %vm108, %v77, 0
    %v116 = vsel %vm108, %v78, 0
    %v119 = vsel %vm108, %v79, 0
    %v122 = vsel %vm108, %v80, 0
    %v125 = vsel %vm108, %v81, 0
    %v128 = vsel %vm108, %v82, 0
    %v131 = vsel %vm108, %v83, 0
    %133 = vmatpush.bf16.msra.mxu0 0
    %134 = vmatpush.bf16.msra.mxu0 0
    %135 = vmatpush.bf16.msra.mxu0 0
    %136 = vmatpush.bf16.msra.mxu0 0
    %137 = vmatpush.bf16.msra.mxu0 %v103
    %138 = vmatpush.bf16.msra.mxu0 %v102
    %139 = vmatpush.bf16.msra.mxu0 %v101
    %140 = vmatpush.bf16.msra.mxu0 %v100
    %141 = vmatmul.bf16.gmra.mxu0 %v110
    %v142 = vpop.f32.mrf.mxu0
    %v143 = vadd.f32 %v42, %v142
    %v144 = vpop.f32.mrf.mxu0
    %v145 = vadd.f32 %v42, %v144
    %146 = vmatmul.bf16.gmra.mxu0 %v113
    %v147 = vpop.f32.mrf.mxu0
    %v148 = vadd.f32 %v42, %v147
    %v149 = vpop.f32.mrf.mxu0
    %v150 = vadd.f32 %v42, %v149
    %151 = vmatmul.bf16.gmra.mxu0 %v116
    %v152 = vpop.f32.mrf.mxu0
    %v153 = vadd.f32 %v42, %v152
    %v154 = vpop.f32.mrf.mxu0
    %v155 = vadd.f32 %v42, %v154
    %156 = vmatmul.bf16.gmra.mxu0 %v119
    %v157 = vpop.f32.mrf.mxu0
    %v158 = vadd.f32 %v42, %v157
    %v159 = vpop.f32.mrf.mxu0
    %v160 = vadd.f32 %v42, %v159
    %161 = vmatmul.bf16.gmra.mxu0 %v122
    %v162 = vpop.f32.mrf.mxu0
    %v163 = vadd.f32 %v42, %v162
    %v164 = vpop.f32.mrf.mxu0
    %v165 = vadd.f32 %v42, %v164
    %166 = vmatmul.bf16.gmra.mxu0 %v125
    %v167 = vpop.f32.mrf.mxu0
    %v168 = vadd.f32 %v42, %v167
    %v169 = vpop.f32.mrf.mxu0
    %v170 = vadd.f32 %v42, %v169
    %171 = vmatmul.bf16.gmra.mxu0 %v128
    %v172 = vpop.f32.mrf.mxu0
    %v173 = vadd.f32 %v42, %v172
    %v174 = vpop.f32.mrf.mxu0
    %v175 = vadd.f32 %v42, %v174
    %176 = vmatmul.bf16.gmra.mxu0 %v131
    %v177 = vpop.f32.mrf.mxu0
    %v178 = vadd.f32 %v42, %v177
    %v179 = vpop.f32.mrf.mxu0
    %v180 = vadd.f32 %v42, %v179
    %181 = vdwg.mxu0
    %182 = vst [vmem:[#allocation2] sm:$0xff] %v143
    %183 = vst [vmem:[#allocation2 + $0x8] sm:$0xff] %v145
    %184 = vst [vmem:[#allocation2 + $0x10] sm:$0xff] %v148
    %185 = vst [vmem:[#allocation2 + $0x18] sm:$0xff] %v150
    %186 = vst [vmem:[#allocation2 + $0x20] sm:$0xff] %v153
    %187 = vst [vmem:[#allocation2 + $0x28] sm:$0xff] %v155
    %188 = vst [vmem:[#allocation2 + $0x30] sm:$0xff] %v158
    %189 = vst [vmem:[#allocation2 + $0x38] sm:$0xff] %v160
    %190 = vst [vmem:[#allocation2 + $0x40] sm:$0xff] %v163
    %191 = vst [vmem:[#allocation2 + $0x48] sm:$0xff] %v165
    %192 = vst [vmem:[#allocation2 + $0x50] sm:$0xff] %v168
    %193 = vst [vmem:[#allocation2 + $0x58] sm:$0xff] %v170
    %194 = vst [vmem:[#allocation2 + $0x60] sm:$0xff] %v173
    %195 = vst [vmem:[#allocation2 + $0x68] sm:$0xff] %v175
    %196 = vst [vmem:[#allocation2 + $0x70] sm:$0xff] %v178
    %197 = vst [vmem:[#allocation2 + $0x78] sm:$0xff] %v180
    // Predicated region
    $region14: #{tpu_custom_call.1} parent=1 // pred_check
      _
    $region15: #{tpu_custom_call.1} parent=1 // pred_check_branch
      %199 = sbr.rel (0) target = $region17
    $region16: #{tpu_custom_call.1} parent=1 // pred_region
      %201 = vsyncadd [#allocation3], 0
      %s202 = sshll.u32 [#allocation2], 4
      %s203 = int_to_ptr.vmem [resolvable:$true] %s202
      %s204 = sshll.u32 %s3, 4
      %s205 = int_to_ptr.hbm [resolvable:$true] %s204
      %210 = dma.vmem_to_hbm [thread:$0]  %s203, 2048, %s205, [#allocation3], 128, 128, 8
    $region17: #{tpu_custom_call.1} parent=1 // pred_fallthru
      _
    // Predicated region
    $region18: #{tpu_custom_call.1} parent=1 // pred_check
      _
    $region19: #{tpu_custom_call.1} parent=1 // pred_check_branch
      %212 = sbr.rel (0) target = $region21
    $region20: #{tpu_custom_call.1} parent=1 // pred_region
      %214 = dma.done [#allocation3], 2048
    $region21: #{tpu_custom_call.1} parent=1 // pred_fallthru
      _
    %215 = vsyncpa [#allocation3], 1

</llo_original>
